<compile_context>
chip_gen: v7x
topology: tpu7x:2x2x1
jax: 0.10.0
libtpu: 0.0.40
codegen_flags: <defaults>
</compile_context>

<pallas_src>
import math

import jax
import jax.numpy as jnp
from jax.experimental import pallas as pl
from jax.experimental.pallas import tpu as pltpu


def _attention_kernel(x_ref, wqkv_ref, wo_ref, mask_ref, scale_len_ref,
                      out_ref, attn_ref):
    # x_ref:         (1, S, H)      activations for this batch element
    # wqkv_ref:      (H, 3H)        fused Q/K/V projection, (in, out) layout
    # wo_ref:        (H, H)         output projection, (in, out) layout
    # mask_ref:      (1, 1, S)      key-padding mask (0 = masked out)
    # scale_len_ref: (1, 1, 1)      sqrt(sequence length) for this batch element
    # out_ref:       (1, S, H)      projected output
    # attn_ref:      (1, nh, S, S)  softmax attention weights (pre length-scaling)
    S = x_ref.shape[1]
    H = x_ref.shape[2]
    nh = attn_ref.shape[1]
    hd = H // nh
    inv_sqrt_hd = 1.0 / math.sqrt(hd)

    x = x_ref[0]                                                    # (S, H)
    # One fused, lane-dense (H, 3H) matmul instead of three separate GEMMs.
    qkv = jnp.dot(x, wqkv_ref[...], preferred_element_type=jnp.float32)  # (S, 3H) f32

    mask = mask_ref[0]                                              # (1, S) int32
    scale_len = scale_len_ref[0]                                    # (1, 1) f32

    ctx_heads = []
    for h in range(nh):  # static loop; nh == 1 for this module (param_head = 1)
        q = qkv[:, h * hd:(h + 1) * hd]                             # (S, hd)
        k = qkv[:, H + h * hd:H + (h + 1) * hd]                     # (S, hd)
        v = qkv[:, 2 * H + h * hd:2 * H + (h + 1) * hd]             # (S, hd)

        # q @ k^T without materializing a transpose (contract last dims).
        energy = jax.lax.dot_general(
            q, k, (((1,), (1,)), ((), ())),
            preferred_element_type=jnp.float32) * inv_sqrt_hd       # (S, S)
        energy = jnp.where(mask == 0, jnp.float32(-1e10), energy)

        # Numerically-stable softmax (matches torch.softmax).
        e_max = jnp.max(energy, axis=-1, keepdims=True)
        unnorm = jnp.exp(energy - e_max)
        attn = unnorm / jnp.sum(unnorm, axis=-1, keepdims=True)     # (S, S)
        attn_ref[0, h] = attn.astype(attn_ref.dtype)

        # TODO(synk): dropout_rate == 0 in the reference module, so dropout is the identity.
        ctx_heads.append(
            jnp.dot(attn * scale_len, v, preferred_element_type=jnp.float32))

    ctx = ctx_heads[0] if nh == 1 else jnp.concatenate(ctx_heads, axis=-1)  # (S, H)

    out = jnp.dot(ctx, wo_ref[...], preferred_element_type=jnp.float32)     # (S, H)
    out_ref[0] = out.astype(out_ref.dtype)


def transformer_block(x, wq, wk, wv, wo, mask, len_sequence, *, n_heads=1):
    """x: (B, S, H); wq/wk/wv/wo: (H, H) in (in, out) layout;
    mask: (B, S) with 0 = padded key; len_sequence: (B,) ints.
    Returns (out (B, S, H), attention (B, n_heads, S, S))."""
    B, S, H = x.shape
    assert H % n_heads == 0, "hidden dim must be divisible by n_heads"

    # Fuse the three projections -> one lane-dense (H, 3H) weight.
    wqkv = jnp.concatenate([wq, wk, wv], axis=1)                     # (H, 3H)
    mask3 = mask.reshape(B, 1, S).astype(jnp.int32)                  # (B, 1, S)
    scale_len = jnp.sqrt(len_sequence.astype(jnp.float32)).reshape(B, 1, 1)

    out_shapes = (
        jax.ShapeDtypeStruct((B, S, H), x.dtype),
        jax.ShapeDtypeStruct((B, n_heads, S, S), jnp.float32),
    )

    out, attn = pl.pallas_call(
        _attention_kernel,
        out_shape=out_shapes,
        grid_spec=pltpu.PrefetchScalarGridSpec(
            num_scalar_prefetch=0,
            grid=(B,),  # one grid step per batch element -> pipelined DMA
            in_specs=[
                pl.BlockSpec((1, S, H), lambda b: (b, 0, 0)),
                # Constant index_map: weights stay VMEM-resident across steps.
                pl.BlockSpec((H, 3 * H), lambda b: (0, 0)),
                pl.BlockSpec((H, H), lambda b: (0, 0)),
                pl.BlockSpec((1, 1, S), lambda b: (b, 0, 0)),
                pl.BlockSpec((1, 1, 1), lambda b: (b, 0, 0)),
            ],
            out_specs=[
                pl.BlockSpec((1, S, H), lambda b: (b, 0, 0)),
                pl.BlockSpec((1, n_heads, S, S), lambda b: (b, 0, 0, 0)),
            ],
        ),
        compiler_params=pltpu.CompilerParams(
            # Batch axis is embarrassingly parallel -> shards across both
            # TensorCores on v7x; harmless on v5e/v6e.
            dimension_semantics=("parallel",),
        ),
    )(x, wqkv, wo, mask3, scale_len)

    return out, attn


def _reference(x, wq, wk, wv, wo, mask, len_sequence, n_heads):
    """Pure-JAX transcription of the PyTorch forward."""
    B, S, H = x.shape
    hd = H // n_heads

    def split_heads(t):
        return t.reshape(B, S, n_heads, hd).transpose(0, 2, 1, 3)

    Q, K, V = split_heads(x @ wq), split_heads(x @ wk), split_heads(x @ wv)
    energy = jnp.einsum("bhqd,bhkd->bhqk", Q, K) / jnp.sqrt(jnp.float32(hd))
    energy = jnp.where(mask[:, None, None, :] == 0, -1e10, energy)
    attn = jax.nn.softmax(energy, axis=-1)
    scale_len = jnp.sqrt(len_sequence.astype(jnp.float32))[:, None, None, None]
    ctx = jnp.einsum("bhqk,bhkd->bhqd", attn * scale_len, V)
    ctx = ctx.transpose(0, 2, 1, 3).reshape(B, S, H)
    return ctx @ wo, attn


if __name__ == "__main__":
    # Small shapes consistent with the module: param_hidden=128, param_head=1.
    batch, seq, hidden, n_heads = 2, 16, 128, 1

    key = jax.random.PRNGKey(0)
    kx, kq, kk, kv, ko = jax.random.split(key, 5)

    x = jax.random.normal(kx, (batch, seq, hidden), dtype=jnp.float32)
    bound = 1.0 / math.sqrt(hidden)
    # Weights stored (in, out) == transpose of PyTorch Linear.weight (out, in).
    wq = jax.random.uniform(kq, (hidden, hidden), jnp.float32, -bound, bound)
    wk = jax.random.uniform(kk, (hidden, hidden), jnp.float32, -bound, bound)
    wv = jax.random.uniform(kv, (hidden, hidden), jnp.float32, -bound, bound)
    wo = jax.random.uniform(ko, (hidden, hidden), jnp.float32, -bound, bound)

    # Key-padding mask + per-batch valid sequence lengths (x_meta contents).
    len_sequence = jnp.array([seq, 11], dtype=jnp.int32)
    pos = jnp.arange(seq)[None, :]
    mask = (pos < len_sequence[:, None]).astype(jnp.int32)          # (batch, seq)

    # TODO(synk): the return_single=True branch (fc_o: Linear(n_timestamp, 1)) is
    # shape-inconsistent in the reference and unused; only the default
    # return_single=False path is implemented.

    out, attn = transformer_block(x, wq, wk, wv, wo, mask, len_sequence,
                                  n_heads=n_heads)
    jax.block_until_ready((out, attn))

    out_ref, attn_ref = _reference(x, wq, wk, wv, wo, mask, len_sequence, n_heads)
    assert jnp.allclose(out, out_ref, atol=2e-4, rtol=2e-4)
    assert jnp.allclose(attn, attn_ref, atol=2e-4, rtol=2e-4)

    print("KERNEL_OK")
</pallas_src>

<mosaic_0001>
module attributes {stable_mosaic.version = 11 : i64} {
  func.func @_attention_kernel(%arg0: i32, %arg1: memref<1x16x128xf32, #tpu.memory_space<vmem>>, %arg2: memref<128x384xf32, #tpu.memory_space<vmem>>, %arg3: memref<128x128xf32, #tpu.memory_space<vmem>>, %arg4: memref<1x1x16xi32, #tpu.memory_space<vmem>>, %arg5: memref<1x1x1xf32, #tpu.memory_space<vmem>>, %arg6: memref<1x16x128xf32, #tpu.memory_space<vmem>>, %arg7: memref<1x1x16x16xf32, #tpu.memory_space<vmem>>) attributes {dimension_semantics = [#tpu.dimension_semantics<parallel>], iteration_bounds = array<i64: 2>, scalar_prefetch = 0 : i64, scratch_operands = 0 : i64, tpu.core_type = #tpu.core_type<tc>, window_params = [{transform_indices = @transform_0, window_bounds = array<i64: 1, 16, 128>}, {pipeline_mode = #tpu.pipeline_mode<synchronous>, transform_indices = @transform_1, window_bounds = array<i64: 128, 384>}, {pipeline_mode = #tpu.pipeline_mode<synchronous>, transform_indices = @transform_2, window_bounds = array<i64: 128, 128>}, {transform_indices = @transform_3, window_bounds = array<i64: 1, 1, 16>}, {transform_indices = @transform_4, window_bounds = array<i64: 1, 1, 1>}, {transform_indices = @transform_5, window_bounds = array<i64: 1, 16, 128>}, {transform_indices = @transform_6, window_bounds = array<i64: 1, 1, 16, 16>}]} {
    %c0 = arith.constant 0 : index
    %c0_0 = arith.constant 0 : index
    %c0_1 = arith.constant 0 : index
    %0 = vector.load %arg1[%c0, %c0_0, %c0_1] : memref<1x16x128xf32, #tpu.memory_space<vmem>>, vector<1x16x128xf32>
    %1 = vector.shape_cast %0 : vector<1x16x128xf32> to vector<16x128xf32>
    %c0_2 = arith.constant 0 : index
    %c0_3 = arith.constant 0 : index
    %2 = vector.load %arg2[%c0_2, %c0_3] : memref<128x384xf32, #tpu.memory_space<vmem>>, vector<128x384xf32>
    %cst = arith.constant dense<0.000000e+00> : vector<16x384xf32>
    %3 = tpu.matmul %1, %2, %cst {dimension_numbers = #tpu.dot_dimension_numbers<[1], [0], [0], [1], [0, 0, 1, 1], [], []>} : vector<16x128xf32>, vector<128x384xf32>, vector<16x384xf32> -> vector<16x384xf32>
    %c0_4 = arith.constant 0 : index
    %c0_5 = arith.constant 0 : index
    %c0_6 = arith.constant 0 : index
    %4 = vector.load %arg4[%c0_4, %c0_5, %c0_6] : memref<1x1x16xi32, #tpu.memory_space<vmem>>, vector<1x1x16xi32>
    %5 = vector.shape_cast %4 : vector<1x1x16xi32> to vector<1x16xi32>
    %c0_7 = arith.constant 0 : index
    %c0_8 = arith.constant 0 : index
    %c0_9 = arith.constant 0 : index
    %6 = vector.load %arg5[%c0_7, %c0_8, %c0_9] : memref<1x1x1xf32, #tpu.memory_space<vmem>>, vector<1x1x1xf32>
    %7 = vector.shape_cast %6 : vector<1x1x1xf32> to vector<1x1xf32>
    %8 = vector.extract_strided_slice %3 {offsets = [0, 0], sizes = [16, 128], strides = [1, 1]} : vector<16x384xf32> to vector<16x128xf32>
    %9 = vector.extract_strided_slice %3 {offsets = [0, 128], sizes = [16, 128], strides = [1, 1]} : vector<16x384xf32> to vector<16x128xf32>
    %10 = vector.extract_strided_slice %3 {offsets = [0, 256], sizes = [16, 128], strides = [1, 1]} : vector<16x384xf32> to vector<16x128xf32>
    %cst_10 = arith.constant dense<0.000000e+00> : vector<16x16xf32>
    %11 = tpu.matmul %8, %9, %cst_10 {dimension_numbers = #tpu.dot_dimension_numbers<[1], [1], [0], [0], [0, 0, 1, 0], [], []>} : vector<16x128xf32>, vector<16x128xf32>, vector<16x16xf32> -> vector<16x16xf32>
    %cst_11 = arith.constant 0.0883883461 : f32
    %12 = vector.broadcast %cst_11 : f32 to vector<16x16xf32>
    %13 = arith.mulf %11, %12 : vector<16x16xf32>
    %c0_i32 = arith.constant 0 : i32
    %14 = vector.broadcast %c0_i32 : i32 to vector<1x16xi32>
    %15 = arith.cmpi eq, %5, %14 : vector<1x16xi32>
    %cst_12 = arith.constant -1.000000e+10 : f32
    %16 = vector.shape_cast %15 : vector<1x16xi1> to vector<1x16xi1>
    %17 = vector.broadcast %16 : vector<1x16xi1> to vector<16x16xi1>
    %18 = vector.broadcast %cst_12 : f32 to vector<16x16xf32>
    %19 = arith.select %17, %18, %13 : vector<16x16xi1>, vector<16x16xf32>
    %cst_13 = arith.constant dense<0xFF800000> : vector<16xf32>
    %20 = vector.multi_reduction <maximumf>, %19, %cst_13 [1] : vector<16x16xf32> to vector<16xf32>
    %21 = vector.shape_cast %20 : vector<16xf32> to vector<16x1xf32>
    %22 = vector.broadcast %21 : vector<16x1xf32> to vector<16x16xf32>
    %23 = arith.subf %19, %22 : vector<16x16xf32>
    %24 = math.exp %23 : vector<16x16xf32>
    %cst_14 = arith.constant dense<0.000000e+00> : vector<16xf32>
    %25 = vector.multi_reduction <add>, %24, %cst_14 [1] : vector<16x16xf32> to vector<16xf32>
    %26 = vector.shape_cast %25 : vector<16xf32> to vector<16x1xf32>
    %27 = vector.broadcast %26 : vector<16x1xf32> to vector<16x16xf32>
    %28 = arith.divf %24, %27 : vector<16x16xf32>
    %c0_15 = arith.constant 0 : index
    %c0_16 = arith.constant 0 : index
    %c0_17 = arith.constant 0 : index
    %c0_18 = arith.constant 0 : index
    %29 = vector.load %arg7[%c0_15, %c0_16, %c0_17, %c0_18] : memref<1x1x16x16xf32, #tpu.memory_space<vmem>>, vector<1x1x16x16xf32>
    %30 = vector.shape_cast %29 : vector<1x1x16x16xf32> to vector<16x16xf32>
    %31 = vector.shape_cast %28 : vector<16x16xf32> to vector<1x1x16x16xf32>
    tpu.vector_store %arg7[%c0_15, %c0_16, %c0_17, %c0_18], %31 {strides = array<i32>} : memref<1x1x16x16xf32, #tpu.memory_space<vmem>>, vector<1x1x16x16xf32>,
    %32 = vector.broadcast %7 : vector<1x1xf32> to vector<16x16xf32>
    %33 = arith.mulf %28, %32 : vector<16x16xf32>
    %cst_19 = arith.constant dense<0.000000e+00> : vector<16x128xf32>
    %34 = tpu.matmul %33, %10, %cst_19 {dimension_numbers = #tpu.dot_dimension_numbers<[1], [0], [0], [1], [0, 0, 1, 1], [], []>} : vector<16x16xf32>, vector<16x128xf32>, vector<16x128xf32> -> vector<16x128xf32>
    %c0_20 = arith.constant 0 : index
    %c0_21 = arith.constant 0 : index
    %35 = vector.load %arg3[%c0_20, %c0_21] : memref<128x128xf32, #tpu.memory_space<vmem>>, vector<128x128xf32>
    %cst_22 = arith.constant dense<0.000000e+00> : vector<16x128xf32>
    %36 = tpu.matmul %34, %35, %cst_22 {dimension_numbers = #tpu.dot_dimension_numbers<[1], [0], [0], [1], [0, 0, 1, 1], [], []>} : vector<16x128xf32>, vector<128x128xf32>, vector<16x128xf32> -> vector<16x128xf32>
    %c0_23 = arith.constant 0 : index
    %c0_24 = arith.constant 0 : index
    %c0_25 = arith.constant 0 : index
    %37 = vector.load %arg6[%c0_23, %c0_24, %c0_25] : memref<1x16x128xf32, #tpu.memory_space<vmem>>, vector<1x16x128xf32>
    %38 = vector.shape_cast %37 : vector<1x16x128xf32> to vector<16x128xf32>
    %39 = vector.shape_cast %36 : vector<16x128xf32> to vector<1x16x128xf32>
    tpu.vector_store %arg6[%c0_23, %c0_24, %c0_25], %39 {strides = array<i32>} : memref<1x16x128xf32, #tpu.memory_space<vmem>>, vector<1x16x128xf32>,
    return
  }
  func.func @transform_0(%arg0: i32) -> (i32, i32, i32) {
    %c0_i32 = arith.constant 0 : i32
    %c0_i32_0 = arith.constant 0 : i32
    %c0_i32_1 = arith.constant 0 : i32
    return %arg0, %c0_i32, %c0_i32_0 : i32, i32, i32
  }
  func.func @transform_1(%arg0: i32) -> (i32, i32) {
    %c0_i32 = arith.constant 0 : i32
    %c0_i32_0 = arith.constant 0 : i32
    %c0_i32_1 = arith.constant 0 : i32
    return %c0_i32, %c0_i32_0 : i32, i32
  }
  func.func @transform_2(%arg0: i32) -> (i32, i32) {
    %c0_i32 = arith.constant 0 : i32
    %c0_i32_0 = arith.constant 0 : i32
    %c0_i32_1 = arith.constant 0 : i32
    return %c0_i32, %c0_i32_0 : i32, i32
  }
  func.func @transform_3(%arg0: i32) -> (i32, i32, i32) {
    %c0_i32 = arith.constant 0 : i32
    %c0_i32_0 = arith.constant 0 : i32
    %c0_i32_1 = arith.constant 0 : i32
    return %arg0, %c0_i32, %c0_i32_0 : i32, i32, i32
  }
  func.func @transform_4(%arg0: i32) -> (i32, i32, i32) {
    %c0_i32 = arith.constant 0 : i32
    %c0_i32_0 = arith.constant 0 : i32
    %c0_i32_1 = arith.constant 0 : i32
    return %arg0, %c0_i32, %c0_i32_0 : i32, i32, i32
  }
  func.func @transform_5(%arg0: i32) -> (i32, i32, i32) {
    %c0_i32 = arith.constant 0 : i32
    %c0_i32_0 = arith.constant 0 : i32
    %c0_i32_1 = arith.constant 0 : i32
    return %arg0, %c0_i32, %c0_i32_0 : i32, i32, i32
  }
  func.func @transform_6(%arg0: i32) -> (i32, i32, i32, i32) {
    %c0_i32 = arith.constant 0 : i32
    %c0_i32_0 = arith.constant 0 : i32
    %c0_i32_1 = arith.constant 0 : i32
    %c0_i32_2 = arith.constant 0 : i32
    return %arg0, %c0_i32, %c0_i32_0, %c0_i32_1 : i32, i32, i32, i32
  }
}

</mosaic_0001>

<llo_original>
// kernel: tpu_custom_call.1
$region0: #{tpu_custom_call.1}
  #allocation0 [shape = 'u32[]', space=smem, size = 0x4, offset = 0x4, fixed_abs, tag = 'smem constant byte address 0x4 - core index']
  #allocation1 [shape = 'u32[144,128]{1,0:T(1,128)}', space=vmem, size = 0x12000, scoped, tag = 'internal scratch']
  %s0 = inlined_call_operand.hbm [shape: f32[2,16,128], index: 0, kind: input, shape index: {}]
  %s1 = inlined_call_operand.hbm [shape: f32[128,384], index: 1, kind: input, shape index: {}]
  %s2 = inlined_call_operand.hbm [shape: f32[128,128], index: 2, kind: input, shape index: {}]
  %s3 = inlined_call_operand.vmem [shape: s32[2,1,16], index: 3, kind: input, shape index: {}]
  %s4 = inlined_call_operand.vmem [shape: f32[2,1,1], index: 4, kind: input, shape index: {}]
  %s5 = inlined_call_operand.hbm [shape: f32[2,16,128], index: 5, kind: output, shape index: {0}]
  %s6 = inlined_call_operand.hbm [shape: f32[2,1,16,16], index: 6, kind: output, shape index: {1}]
  %7 = xla_tuple %s5, %s6
  %s8 = sld [smem:[#allocation0]]
  $region73: #{tpu_custom_call.1} parent=0
    _
  %s10 = ssub.s32 1, %s8
  %s11 = scalar_select 0, %s10, %s8
  $region1: #{tpu_custom_call.1} parent=0
    #allocation2 [shape = 'u8[16384]{0}', space=vmem, size = 0x4000, scoped, tag = 'input window, operand 0']
    #allocation3 [shape = 's32[2]{0}', space=sflag, size = 0x8, scoped, tag = 'scoped memory for tpu_custom_call.1']
    #allocation4 [shape = 's32[2]{0}', space=sflag, size = 0x8, scoped, tag = 'scoped memory for tpu_custom_call.1']
    #allocation5 [shape = 'u8[196608]{0}', space=vmem, size = 0x30000, scoped, tag = 'input window, operand 1, single buffered']
    #allocation6 [shape = 's32[1]{0}', space=sflag, size = 0x4, scoped, tag = 'scoped memory for tpu_custom_call.1']
    #allocation7 [shape = 'u8[65536]{0}', space=vmem, size = 0x10000, scoped, tag = 'input window, operand 2, single buffered']
    #allocation8 [shape = 'u8[16384]{0}', space=vmem, size = 0x4000, scoped, tag = 'output window, operand 0']
    #allocation9 [shape = 'u8[16384]{0}', space=vmem, size = 0x4000, scoped, tag = 'output window, operand 1']
    #allocation10 [shape = 's32[2]{0}', space=sflag, size = 0x8, scoped, tag = 'scoped memory for tpu_custom_call.1']
    %12 = vsyncpa [#allocation3], 0
    %s13 = scalar_lea.sflag [#allocation3], 1
    %14 = vsyncpa %s13, 0
    %15 = vsyncpa [#allocation6], 0
    %16 = vsyncpa [#allocation4], 0
    %s17 = scalar_lea.sflag [#allocation4], 1
    %18 = vsyncpa %s17, 0
    %19 = vsyncpa [#allocation10], 0
    %s20 = scalar_lea.sflag [#allocation10], 1
    %21 = vsyncpa %s20, 0
    loop: start=0, step=1, limit=4
    $region2: #{tpu_custom_call.1} parent=1 // loop_pre_header
      _
    $region3: #{tpu_custom_call.1} parent=1 // loop_header
      %s23 = sphi 0, %s27
      %p24 = scmp.ge.s32.totalorder %s23, 4
      %s33 = sphi 0, %s35
      %s36 = sphi 0, %s33
      %s37 = sphi 0, %s36
      %s53 = sphi 0, %s37
      %s57 = sphi 0, %s57
      %s59 = sphi 0, %s57
      %s60 = sphi 0, %s59
      %s74 = sphi 0, %s60
      %s78 = sphi 0, %s78
      %s80 = sphi 0, %s78
      %s81 = sphi 0, %s80
      %s95 = sphi 0, %s81
      %s101 = sphi 0, %s103
      %s104 = sphi 0, %s101
      %s105 = sphi 0, %s104
      %s121 = sphi 0, %s105
      %s127 = sphi 0, %s129
      %s130 = sphi 0, %s127
      %s131 = sphi 0, %s130
      %s147 = sphi 0, %s131
      %s153 = sphi 0, %s155
      %s156 = sphi 0, %s153
      %s157 = sphi 0, %s156
      %s173 = sphi 0, %s157
      %s179 = sphi 0, %s181
      %s182 = sphi 0, %s179
      %s183 = sphi 0, %s182
      %s199 = sphi 0, %s183
    $region4: #{tpu_custom_call.1} parent=1 // loop_header_branch
      %26 = sbr.rel (%p24) target = $region8
    $region5: #{tpu_custom_call.1} parent=1 // loop_body
      %s28 = ssub.s32 %s23, 1
      %s29 = ssub.s32 %s23, 2
      %s30 = sadd.s32 %s23, 1
      %s31 = ssub.s32 %s23, %s30
      %p32 = scmp.eq.s32.totalorder %s31, 0
      %s34 = sadd.s32 %s33, 1
      %s35 = scalar_select %p32, %s33, %s34
      %p38 = pneg %p32
      %p39 = scmp.eq.s32.totalorder %s23, 1
      %p40 = por %p38, %p39
      %p41 = scmp.ne.s32.totalorder %s33, %s36
      %p42 = scmp.eq.s32.totalorder %s23, 0
      %p43 = por %p41, %p42
      %p44 = scmp.ne.s32.totalorder %s33, %s36
      %p45 = scmp.eq.s32.totalorder %s28, 1
      %p46 = por %p44, %p45
      %p47 = scmp.ne.s32.totalorder %s36, %s37
      %p48 = scmp.eq.s32.totalorder %s28, 0
      %p49 = por %p47, %p48
      %p50 = scmp.ne.s32.totalorder %s36, %s37
      %p51 = scmp.eq.s32.totalorder %s29, 1
      %p52 = por %p50, %p51
      %p54 = scmp.ne.s32.totalorder %s37, %s53
      %p55 = scmp.eq.s32.totalorder %s29, 0
      %p56 = por %p54, %p55
      %s58 = sadd.s32 %s57, 1
      %p61 = scmp.eq.s32.totalorder %s23, 1
      %p62 = scmp.ne.s32.totalorder %s57, %s59
      %p63 = scmp.eq.s32.totalorder %s23, 0
      %p64 = por %p62, %p63
      %p65 = scmp.ne.s32.totalorder %s57, %s59
      %p66 = scmp.eq.s32.totalorder %s28, 1
      %p67 = por %p65, %p66
      %p68 = scmp.ne.s32.totalorder %s59, %s60
      %p69 = scmp.eq.s32.totalorder %s28, 0
      %p70 = por %p68, %p69
      %p71 = scmp.ne.s32.totalorder %s59, %s60
      %p72 = scmp.eq.s32.totalorder %s29, 1
      %p73 = por %p71, %p72
      %p75 = scmp.ne.s32.totalorder %s60, %s74
      %p76 = scmp.eq.s32.totalorder %s29, 0
      %p77 = por %p75, %p76
      %s79 = sadd.s32 %s78, 1
      %p82 = scmp.eq.s32.totalorder %s23, 1
      %p83 = scmp.ne.s32.totalorder %s78, %s80
      %p84 = scmp.eq.s32.totalorder %s23, 0
      %p85 = por %p83, %p84
      %p86 = scmp.ne.s32.totalorder %s78, %s80
      %p87 = scmp.eq.s32.totalorder %s28, 1
      %p88 = por %p86, %p87
      %p89 = scmp.ne.s32.totalorder %s80, %s81
      %p90 = scmp.eq.s32.totalorder %s28, 0
      %p91 = por %p89, %p90
      %p92 = scmp.ne.s32.totalorder %s80, %s81
      %p93 = scmp.eq.s32.totalorder %s29, 1
      %p94 = por %p92, %p93
      %p96 = scmp.ne.s32.totalorder %s81, %s95
      %p97 = scmp.eq.s32.totalorder %s29, 0
      %p98 = por %p96, %p97
      %s99 = ssub.s32 %s23, %s30
      %p100 = scmp.eq.s32.totalorder %s99, 0
      %s102 = sadd.s32 %s101, 1
      %s103 = scalar_select %p100, %s101, %s102
      %p106 = pneg %p100
      %p107 = scmp.eq.s32.totalorder %s23, 1
      %p108 = por %p106, %p107
      %p109 = scmp.ne.s32.totalorder %s101, %s104
      %p110 = scmp.eq.s32.totalorder %s23, 0
      %p111 = por %p109, %p110
      %p112 = scmp.ne.s32.totalorder %s101, %s104
      %p113 = scmp.eq.s32.totalorder %s28, 1
      %p114 = por %p112, %p113
      %p115 = scmp.ne.s32.totalorder %s104, %s105
      %p116 = scmp.eq.s32.totalorder %s28, 0
      %p117 = por %p115, %p116
      %p118 = scmp.ne.s32.totalorder %s104, %s105
      %p119 = scmp.eq.s32.totalorder %s29, 1
      %p120 = por %p118, %p119
      %p122 = scmp.ne.s32.totalorder %s105, %s121
      %p123 = scmp.eq.s32.totalorder %s29, 0
      %p124 = por %p122, %p123
      %s125 = ssub.s32 %s23, %s30
      %p126 = scmp.eq.s32.totalorder %s125, 0
      %s128 = sadd.s32 %s127, 1
      %s129 = scalar_select %p126, %s127, %s128
      %p132 = pneg %p126
      %p133 = scmp.eq.s32.totalorder %s23, 1
      %p134 = por %p132, %p133
      %p135 = scmp.ne.s32.totalorder %s127, %s130
      %p136 = scmp.eq.s32.totalorder %s23, 0
      %p137 = por %p135, %p136
      %p138 = scmp.ne.s32.totalorder %s127, %s130
      %p139 = scmp.eq.s32.totalorder %s28, 1
      %p140 = por %p138, %p139
      %p141 = scmp.ne.s32.totalorder %s130, %s131
      %p142 = scmp.eq.s32.totalorder %s28, 0
      %p143 = por %p141, %p142
      %p144 = scmp.ne.s32.totalorder %s130, %s131
      %p145 = scmp.eq.s32.totalorder %s29, 1
      %p146 = por %p144, %p145
      %p148 = scmp.ne.s32.totalorder %s131, %s147
      %p149 = scmp.eq.s32.totalorder %s29, 0
      %p150 = por %p148, %p149
      %s151 = ssub.s32 %s23, %s30
      %p152 = scmp.eq.s32.totalorder %s151, 0
      %s154 = sadd.s32 %s153, 1
      %s155 = scalar_select %p152, %s153, %s154
      %p158 = pneg %p152
      %p159 = scmp.eq.s32.totalorder %s23, 1
      %p160 = por %p158, %p159
      %p161 = scmp.ne.s32.totalorder %s153, %s156
      %p162 = scmp.eq.s32.totalorder %s23, 0
      %p163 = por %p161, %p162
      %p164 = scmp.ne.s32.totalorder %s153, %s156
      %p165 = scmp.eq.s32.totalorder %s28, 1
      %p166 = por %p164, %p165
      %p167 = scmp.ne.s32.totalorder %s156, %s157
      %p168 = scmp.eq.s32.totalorder %s28, 0
      %p169 = por %p167, %p168
      %p170 = scmp.ne.s32.totalorder %s156, %s157
      %p171 = scmp.eq.s32.totalorder %s29, 1
      %p172 = por %p170, %p171
      %p174 = scmp.ne.s32.totalorder %s157, %s173
      %p175 = scmp.eq.s32.totalorder %s29, 0
      %p176 = por %p174, %p175
      %s177 = ssub.s32 %s23, %s30
      %p178 = scmp.eq.s32.totalorder %s177, 0
      %s180 = sadd.s32 %s179, 1
      %s181 = scalar_select %p178, %s179, %s180
      %p184 = pneg %p178
      %p185 = scmp.eq.s32.totalorder %s23, 1
      %p186 = por %p184, %p185
      %p187 = scmp.ne.s32.totalorder %s179, %s182
      %p188 = scmp.eq.s32.totalorder %s23, 0
      %p189 = por %p187, %p188
      %p190 = scmp.ne.s32.totalorder %s179, %s182
      %p191 = scmp.eq.s32.totalorder %s28, 1
      %p192 = por %p190, %p191
      %p193 = scmp.ne.s32.totalorder %s182, %s183
      %p194 = scmp.eq.s32.totalorder %s28, 0
      %p195 = por %p193, %p194
      %p196 = scmp.ne.s32.totalorder %s182, %s183
      %p197 = scmp.eq.s32.totalorder %s29, 1
      %p198 = por %p196, %p197
      %p200 = scmp.ne.s32.totalorder %s183, %s199
      %p201 = scmp.eq.s32.totalorder %s29, 0
      %p202 = por %p200, %p201
      %p203 = scmp.le.s32.totalorder 1, %s23
      %p204 = scmp.lt.s32.totalorder %s23, 3
      %p205 = pnand %p203, %p204
      %p206 = pneg %p205
      // Predicated region
      $region9: #{tpu_custom_call.1} parent=5 // pred_check
        _
      $region10: #{tpu_custom_call.1} parent=5 // pred_check_branch
        %208 = sbr.rel (%p205) target = $region12
      $region11: #{tpu_custom_call.1} parent=5 // pred_region
        %s209 = ssub.s32 %s23, 1
        // Predicated region
        $region13: #{tpu_custom_call.1} parent=11 // pred_check
          %p210 = pneg %p70
        $region14: #{tpu_custom_call.1} parent=11 // pred_check_branch
          %212 = sbr.rel (%p210) target = $region16
        $region15: #{tpu_custom_call.1} parent=11 // pred_region
          %s214 = ssub.s32 6144, 6144
          %215 = vsyncadd [#allocation6], %s214
          %s216 = sshll.u32 [#allocation5], 4
          %s217 = int_to_ptr.vmem [resolvable:$true] %s216
          %222 = dma.hbm_to_vmem [thread:$0]  %s1, 6144, %s217, [#allocation6], 384, 384, 24
        $region16: #{tpu_custom_call.1} parent=11 // pred_fallthru
          _
        // Predicated region
        $region17: #{tpu_custom_call.1} parent=11 // pred_check
          %p223 = pneg %p91
        $region18: #{tpu_custom_call.1} parent=11 // pred_check_branch
          %225 = sbr.rel (%p223) target = $region20
        $region19: #{tpu_custom_call.1} parent=11 // pred_region
          %s227 = ssub.s32 2048, 2048
          %228 = vsyncadd [#allocation6], %s227
          %s229 = sshll.u32 [#allocation7], 4
          %s230 = int_to_ptr.vmem [resolvable:$true] %s229
          %235 = dma.hbm_to_vmem [thread:$0]  %s2, 2048, %s230, [#allocation6], 128, 128, 8
        $region20: #{tpu_custom_call.1} parent=11 // pred_fallthru
          _
      $region12: #{tpu_custom_call.1} parent=5 // pred_fallthru
        _
      %p236 = scmp.lt.s32.totalorder %s23, 2
      // Predicated region
      $region21: #{tpu_custom_call.1} parent=5 // pred_check
        %p237 = pneg %p236
      $region22: #{tpu_custom_call.1} parent=5 // pred_check_branch
        %239 = sbr.rel (%p237) target = $region24
      $region23: #{tpu_custom_call.1} parent=5 // pred_region
        // Predicated region
        $region25: #{tpu_custom_call.1} parent=23 // pred_check
          %p240 = pneg %p43
        $region26: #{tpu_custom_call.1} parent=23 // pred_check_branch
          %242 = sbr.rel (%p240) target = $region28
        $region27: #{tpu_custom_call.1} parent=23 // pred_region
          %s243 = sand.u32 %s33, 1
          %s244 = scalar_lea.sflag [#allocation3], %s243
          %s245 = sand.u32 %s33, 1
          %s246 = smul.addr %s245, 16
          %s247 = scalar_lea.vmem [#allocation2], %s246
          %s249 = ssub.s32 256, 256
          %250 = vsyncadd %s244, %s249
          %s251 = smul.addr %s23, 2
          %s252 = smul.addr %s251, 128
          %s253 = scalar_lea.hbm %s0, %s252
          %s254 = sshll.u32 %s247, 4
          %s255 = int_to_ptr.vmem [resolvable:$true] %s254
          %260 = dma.hbm_to_vmem [thread:$0]  %s253, 256, %s255, %s244, 128, 128, 8
        $region28: #{tpu_custom_call.1} parent=23 // pred_fallthru
          _
        // Predicated region
        $region29: #{tpu_custom_call.1} parent=23 // pred_check
          %p261 = pneg %p111
        $region30: #{tpu_custom_call.1} parent=23 // pred_check_branch
          %263 = sbr.rel (%p261) target = $region32
        $region31: #{tpu_custom_call.1} parent=23 // pred_region
          %p264 = scmp.lt.s32.totalorder %s23, 1
          %s265 = scalar_select %p264, %s23, 1
          %s266 = scalar_lea.vmem %s3, %s265
        $region32: #{tpu_custom_call.1} parent=23 // pred_fallthru
          _
        // Predicated region
        $region33: #{tpu_custom_call.1} parent=23 // pred_check
          %p267 = pneg %p137
        $region34: #{tpu_custom_call.1} parent=23 // pred_check_branch
          %269 = sbr.rel (%p267) target = $region36
        $region35: #{tpu_custom_call.1} parent=23 // pred_region
          %p270 = scmp.lt.s32.totalorder %s23, 1
          %s271 = scalar_select %p270, %s23, 1
          %s272 = scalar_lea.vmem %s4, %s271
        $region36: #{tpu_custom_call.1} parent=23 // pred_fallthru
          _
      $region24: #{tpu_custom_call.1} parent=5 // pred_fallthru
        _
      %p273 = scmp.le.s32.totalorder 1, %s23
      %p274 = scmp.lt.s32.totalorder %s23, 3
      %p275 = pnand %p273, %p274
      %p276 = pneg %p275
      // Predicated region
      $region37: #{tpu_custom_call.1} parent=5 // pred_check
        _
      $region38: #{tpu_custom_call.1} parent=5 // pred_check_branch
        %278 = sbr.rel (%p275) target = $region40
      $region39: #{tpu_custom_call.1} parent=5 // pred_region
        %s279 = ssub.s32 %s23, 1
        %s280 = sand.u32 %s36, 1
        %s281 = scalar_lea.sflag [#allocation3], %s280
        %s282 = sand.u32 %s36, 1
        %s283 = smul.addr %s282, 16
        %s284 = scalar_lea.vmem [#allocation2], %s283
        // Predicated region
        $region41: #{tpu_custom_call.1} parent=39 // pred_check
          %p285 = pneg %p49
        $region42: #{tpu_custom_call.1} parent=39 // pred_check_branch
          %287 = sbr.rel (%p285) target = $region44
        $region43: #{tpu_custom_call.1} parent=39 // pred_region
          %288 = dma.done %s281, 256
        $region44: #{tpu_custom_call.1} parent=39 // pred_fallthru
          _
        // Predicated region
        $region45: #{tpu_custom_call.1} parent=39 // pred_check
          %p289 = pneg %p70
        $region46: #{tpu_custom_call.1} parent=39 // pred_check_branch
          %291 = sbr.rel (%p289) target = $region48
        $region47: #{tpu_custom_call.1} parent=39 // pred_region
          %292 = dma.done [#allocation6], 6144
        $region48: #{tpu_custom_call.1} parent=39 // pred_fallthru
          _
        // Predicated region
        $region49: #{tpu_custom_call.1} parent=39 // pred_check
          %p293 = pneg %p91
        $region50: #{tpu_custom_call.1} parent=39 // pred_check_branch
          %295 = sbr.rel (%p293) target = $region52
        $region51: #{tpu_custom_call.1} parent=39 // pred_region
          %296 = dma.done [#allocation6], 2048
        $region52: #{tpu_custom_call.1} parent=39 // pred_fallthru
          _
        %s297 = sand.u32 %s36, 1
        %s298 = scalar_lea.sflag [#allocation3], %s297
        %s299 = sand.u32 %s36, 1
        %s300 = smul.addr %s299, 16
        %s301 = scalar_lea.vmem [#allocation2], %s300
        %p302 = pneg %p49
        %p303 = pneg %p46
        %p304 = pneg %p70
        %p305 = pneg %p67
        %p306 = pneg %p91
        %p307 = pneg %p88
        %p308 = scmp.lt.s32.totalorder %s28, 1
        %s309 = scalar_select %p308, %s28, 1
        %s310 = scalar_lea.vmem %s3, %s309
        %p311 = pneg %p117
        %p312 = pneg %p114
        %p313 = scmp.lt.s32.totalorder %s28, 1
        %s314 = scalar_select %p313, %s28, 1
        %s315 = scalar_lea.vmem %s4, %s314
        %p316 = pneg %p143
        %p317 = pneg %p140
        %p318 = pneg %p169
        %p319 = pneg %p166
        %s320 = sand.u32 %s156, 1
        %s321 = scalar_lea.sflag [#allocation4], %s320
        %s322 = sand.u32 %s156, 1
        %s323 = smul.addr %s322, 16
        %s324 = scalar_lea.vmem [#allocation8], %s323
        %p325 = pneg %p195
        %p326 = pneg %p192
        %s327 = sand.u32 %s182, 1
        %s328 = scalar_lea.sflag [#allocation10], %s327
        %s329 = sand.u32 %s182, 1
        %s330 = smul.addr %s329, 16
        %s331 = scalar_lea.vmem [#allocation9], %s330
        %p332 = scmp.lt.s32.totalorder %s28, 1
        %s333 = scalar_select %p332, %s28, 1
        %s334 = scalar_lea.vmem %s3, %s333
        %p335 = scmp.lt.s32.totalorder %s28, 1
        %s336 = scalar_select %p335, %s28, 1
        %s337 = scalar_lea.vmem %s4, %s336
        %v338 = vld [vmem:[%s284] sm:$0xff]
        %v339 = vld [vmem:[%s284 + $0x8] sm:$0xff]
        %v340 = vld [vmem:[#allocation5] sm:$0xff]
        %v341 = vld [vmem:[#allocation5 + $0x8] sm:$0xff]
        %v342 = vld [vmem:[#allocation5 + $0x10] sm:$0xff]
        %v343 = vld [vmem:[#allocation5 + $0x18] sm:$0xff]
        %v344 = vld [vmem:[#allocation5 + $0x20] sm:$0xff]
        %v345 = vld [vmem:[#allocation5 + $0x28] sm:$0xff]
        %v346 = vld [vmem:[#allocation5 + $0x30] sm:$0xff]
        %v347 = vld [vmem:[#allocation5 + $0x38] sm:$0xff]
        %v348 = vld [vmem:[#allocation5 + $0x40] sm:$0xff]
        %v349 = vld [vmem:[#allocation5 + $0x48] sm:$0xff]
        %v350 = vld [vmem:[#allocation5 + $0x50] sm:$0xff]
        %v351 = vld [vmem:[#allocation5 + $0x58] sm:$0xff]
        %v352 = vld [vmem:[#allocation5 + $0x60] sm:$0xff]
        %v353 = vld [vmem:[#allocation5 + $0x68] sm:$0xff]
        %v354 = vld [vmem:[#allocation5 + $0x70] sm:$0xff]
        %v355 = vld [vmem:[#allocation5 + $0x78] sm:$0xff]
        %v356 = vld [vmem:[#allocation5 + $0x80] sm:$0xff]
        %v357 = vld [vmem:[#allocation5 + $0x88] sm:$0xff]
        %v358 = vld [vmem:[#allocation5 + $0x90] sm:$0xff]
        %v359 = vld [vmem:[#allocation5 + $0x98] sm:$0xff]
        %v360 = vld [vmem:[#allocation5 + $0xa0] sm:$0xff]
        %v361 = vld [vmem:[#allocation5 + $0xa8] sm:$0xff]
        %v362 = vld [vmem:[#allocation5 + $0xb0] sm:$0xff]
        %v363 = vld [vmem:[#allocation5 + $0xb8] sm:$0xff]
        %v364 = vld [vmem:[#allocation5 + $0xc0] sm:$0xff]
        %v365 = vld [vmem:[#allocation5 + $0xc8] sm:$0xff]
        %v366 = vld [vmem:[#allocation5 + $0xd0] sm:$0xff]
        %v367 = vld [vmem:[#allocation5 + $0xd8] sm:$0xff]
        %v368 = vld [vmem:[#allocation5 + $0xe0] sm:$0xff]
        %v369 = vld [vmem:[#allocation5 + $0xe8] sm:$0xff]
        %v370 = vld [vmem:[#allocation5 + $0xf0] sm:$0xff]
        %v371 = vld [vmem:[#allocation5 + $0xf8] sm:$0xff]
        %v372 = vld [vmem:[#allocation5 + $0x100] sm:$0xff]
        %v373 = vld [vmem:[#allocation5 + $0x108] sm:$0xff]
        %v374 = vld [vmem:[#allocation5 + $0x110] sm:$0xff]
        %v375 = vld [vmem:[#allocation5 + $0x118] sm:$0xff]
        %v376 = vld [vmem:[#allocation5 + $0x120] sm:$0xff]
        %v377 = vld [vmem:[#allocation5 + $0x128] sm:$0xff]
        %v378 = vld [vmem:[#allocation5 + $0x130] sm:$0xff]
        %v379 = vld [vmem:[#allocation5 + $0x138] sm:$0xff]
        %v380 = vld [vmem:[#allocation5 + $0x140] sm:$0xff]
        %v381 = vld [vmem:[#allocation5 + $0x148] sm:$0xff]
        %v382 = vld [vmem:[#allocation5 + $0x150] sm:$0xff]
        %v383 = vld [vmem:[#allocation5 + $0x158] sm:$0xff]
        %v384 = vld [vmem:[#allocation5 + $0x160] sm:$0xff]
        %v385 = vld [vmem:[#allocation5 + $0x168] sm:$0xff]
        %v386 = vld [vmem:[#allocation5 + $0x170] sm:$0xff]
        %v387 = vld [vmem:[#allocation5 + $0x178] sm:$0xff]
        %388 = vmatprep.subr.mxu0 %v341
        %389 = vmatpush1.msra.mxu0 %v340
        %390 = vmatprep.subr.mxu0 %v344
        %391 = vmatpush1.msra.mxu0 %v343
        %392 = vmatprep.subr.mxu0 %v347
        %393 = vmatpush1.msra.mxu0 %v346
        %394 = vmatprep.subr.mxu0 %v350
        %395 = vmatpush1.msra.mxu0 %v349
        %396 = vmatprep.subr.mxu0 %v353
        %397 = vmatpush1.msra.mxu0 %v352
        %398 = vmatprep.subr.mxu0 %v356
        %399 = vmatpush1.msra.mxu0 %v355
        %400 = vmatprep.subr.mxu0 %v359
        %401 = vmatpush1.msra.mxu0 %v358
        %402 = vmatprep.subr.mxu0 %v362
        %403 = vmatpush1.msra.mxu0 %v361
        %404 = vmatprep.subr.mxu0 %v365
        %405 = vmatpush1.msra.mxu0 %v364
        %406 = vmatprep.subr.mxu0 %v368
        %407 = vmatpush1.msra.mxu0 %v367
        %408 = vmatprep.subr.mxu0 %v371
        %409 = vmatpush1.msra.mxu0 %v370
        %410 = vmatprep.subr.mxu0 %v374
        %411 = vmatpush1.msra.mxu0 %v373
        %412 = vmatprep.subr.mxu0 %v377
        %413 = vmatpush1.msra.mxu0 %v376
        %414 = vmatprep.subr.mxu0 %v380
        %415 = vmatpush1.msra.mxu0 %v379
        %416 = vmatprep.subr.mxu0 %v383
        %417 = vmatpush1.msra.mxu0 %v382
        %418 = vmatprep.subr.mxu0 %v386
        %419 = vmatpush1.msra.mxu0 %v385
        %420 = vmatprep.subr.mxu0 0.0
        %421 = vmatpush1.msra.mxu0 0.0
        %422 = vmatprep.subr.mxu0 0.0
        %423 = vmatpush1.msra.mxu0 0.0
        %424 = vmatprep.subr.mxu0 0.0
        %425 = vmatpush1.msra.mxu0 0.0
        %426 = vmatprep.subr.mxu0 0.0
        %427 = vmatpush1.msra.mxu0 0.0
        %428 = vmatprep.subr.mxu0 0.0
        %429 = vmatpush1.msra.mxu0 0.0
        %430 = vmatprep.subr.mxu0 0.0
        %431 = vmatpush1.msra.mxu0 0.0
        %432 = vmatprep.subr.mxu0 0.0
        %433 = vmatpush1.msra.mxu0 0.0
        %434 = vmatprep.subr.mxu0 0.0
        %435 = vmatpush1.msra.mxu0 0.0
        %436 = vmatprep.subr.mxu0 0.0
        %437 = vmatpush1.msra.mxu0 0.0
        %438 = vmatprep.subr.mxu0 0.0
        %439 = vmatpush1.msra.mxu0 0.0
        %440 = vmatprep.subr.mxu0 0.0
        %441 = vmatpush1.msra.mxu0 0.0
        %442 = vmatprep.subr.mxu0 0.0
        %443 = vmatpush1.msra.mxu0 0.0
        %444 = vmatprep.subr.mxu0 0.0
        %445 = vmatpush1.msra.mxu0 0.0
        %446 = vmatprep.subr.mxu0 0.0
        %447 = vmatpush1.msra.mxu0 0.0
        %448 = vmatprep.subr.mxu0 0.0
        %449 = vmatpush1.msra.mxu0 0.0
        %450 = vmatprep.subr.mxu0 0.0
        %451 = vmatpush1.msra.mxu0 0.0
        %452 = vmatprep.mubr.f32.mxu0 0.0
        %453 = vmatmul.mubr.f32.gmra.mrb[0].mxu0 %v338
        %v454 = vpop.f32.mrb[0].mxu0
        %v455 = vadd.f32 0.0, %v454
        %v456 = vpop.f32.mrb[0].mxu0
        %v457 = vadd.f32 0.0, %v456
        %458 = vmatprep.mubr.f32.mxu0 0.0
        %459 = vmatmul.mubr.f32.gmra.mrb[0].mxu0 %v339
        %v460 = vpop.f32.mrb[0].mxu0
        %v461 = vadd.f32 0.0, %v460
        %v462 = vpop.f32.mrb[0].mxu0
        %v463 = vadd.f32 0.0, %v462
        %464 = vdwg.mxu0
        %465 = vmatprep.subr.mxu0 0.0
        %466 = vmatpush1.msra.mxu0 %v342
        %467 = vmatprep.subr.mxu0 0.0
        %468 = vmatpush1.msra.mxu0 %v345
        %469 = vmatprep.subr.mxu0 0.0
        %470 = vmatpush1.msra.mxu0 %v348
        %471 = vmatprep.subr.mxu0 0.0
        %472 = vmatpush1.msra.mxu0 %v351
        %473 = vmatprep.subr.mxu0 0.0
        %474 = vmatpush1.msra.mxu0 %v354
        %475 = vmatprep.subr.mxu0 0.0
        %476 = vmatpush1.msra.mxu0 %v357
        %477 = vmatprep.subr.mxu0 0.0
        %478 = vmatpush1.msra.mxu0 %v360
        %479 = vmatprep.subr.mxu0 0.0
        %480 = vmatpush1.msra.mxu0 %v363
        %481 = vmatprep.subr.mxu0 0.0
        %482 = vmatpush1.msra.mxu0 %v366
        %483 = vmatprep.subr.mxu0 0.0
        %484 = vmatpush1.msra.mxu0 %v369
        %485 = vmatprep.subr.mxu0 0.0
        %486 = vmatpush1.msra.mxu0 %v372
        %487 = vmatprep.subr.mxu0 0.0
        %488 = vmatpush1.msra.mxu0 %v375
        %489 = vmatprep.subr.mxu0 0.0
        %490 = vmatpush1.msra.mxu0 %v378
        %491 = vmatprep.subr.mxu0 0.0
        %492 = vmatpush1.msra.mxu0 %v381
        %493 = vmatprep.subr.mxu0 0.0
        %494 = vmatpush1.msra.mxu0 %v384
        %495 = vmatprep.subr.mxu0 0.0
        %496 = vmatpush1.msra.mxu0 %v387
        %497 = vmatprep.subr.mxu0 0.0
        %498 = vmatpush1.msra.mxu0 0.0
        %499 = vmatprep.subr.mxu0 0.0
        %500 = vmatpush1.msra.mxu0 0.0
        %501 = vmatprep.subr.mxu0 0.0
        %502 = vmatpush1.msra.mxu0 0.0
        %503 = vmatprep.subr.mxu0 0.0
        %504 = vmatpush1.msra.mxu0 0.0
        %505 = vmatprep.subr.mxu0 0.0
        %506 = vmatpush1.msra.mxu0 0.0
        %507 = vmatprep.subr.mxu0 0.0
        %508 = vmatpush1.msra.mxu0 0.0
        %509 = vmatprep.subr.mxu0 0.0
        %510 = vmatpush1.msra.mxu0 0.0
        %511 = vmatprep.subr.mxu0 0.0
        %512 = vmatpush1.msra.mxu0 0.0
        %513 = vmatprep.subr.mxu0 0.0
        %514 = vmatpush1.msra.mxu0 0.0
        %515 = vmatprep.subr.mxu0 0.0
        %516 = vmatpush1.msra.mxu0 0.0
        %517 = vmatprep.subr.mxu0 0.0
        %518 = vmatpush1.msra.mxu0 0.0
        %519 = vmatprep.subr.mxu0 0.0
        %520 = vmatpush1.msra.mxu0 0.0
        %521 = vmatprep.subr.mxu0 0.0
        %522 = vmatpush1.msra.mxu0 0.0
        %523 = vmatprep.subr.mxu0 0.0
        %524 = vmatpush1.msra.mxu0 0.0
        %525 = vmatprep.subr.mxu0 0.0
        %526 = vmatpush1.msra.mxu0 0.0
        %527 = vmatprep.subr.mxu0 0.0
        %528 = vmatpush1.msra.mxu0 0.0
        %529 = vmatprep.mubr.f32.mxu0 0.0
        %530 = vmatmul.mubr.f32.gmra.mrb[0].mxu0 %v338
        %v531 = vpop.f32.mrb[0].mxu0
        %v532 = vadd.f32 0.0, %v531
        %v533 = vpop.f32.mrb[0].mxu0
        %534 = vmatprep.mubr.f32.mxu0 0.0
        %535 = vmatmul.mubr.f32.gmra.mrb[0].mxu0 %v339
        %v536 = vpop.f32.mrb[0].mxu0
        %v537 = vadd.f32 0.0, %v536
        %v538 = vpop.f32.mrb[0].mxu0
        %539 = vdwg.mxu0
        %v540 = vld [vmem:[%s334] sm:$0x1]
        %v541 = vld [vmem:[%s337] sm:$0x1]
        %542 = vmatprep.subr.mxu0 0.0
        %543 = vmatpush1.xpose.msra.mxu0 %v457
        %544 = vmatprep.subr.mxu0 0.0
        %545 = vmatpush1.xpose.msra.mxu0 %v463
        %546 = vmatprep.subr.mxu0 0.0
        %547 = vmatpush1.xpose.msra.mxu0 0.0
        %548 = vmatprep.subr.mxu0 0.0
        %549 = vmatpush1.xpose.msra.mxu0 0.0
        %550 = vmatprep.subr.mxu0 0.0
        %551 = vmatpush1.xpose.msra.mxu0 0.0
        %552 = vmatprep.subr.mxu0 0.0
        %553 = vmatpush1.xpose.msra.mxu0 0.0
        %554 = vmatprep.subr.mxu0 0.0
        %555 = vmatpush1.xpose.msra.mxu0 0.0
        %556 = vmatprep.subr.mxu0 0.0
        %557 = vmatpush1.xpose.msra.mxu0 0.0
        %558 = vmatprep.subr.mxu0 0.0
        %559 = vmatpush1.xpose.msra.mxu0 0.0
        %560 = vmatprep.subr.mxu0 0.0
        %561 = vmatpush1.xpose.msra.mxu0 0.0
        %562 = vmatprep.subr.mxu0 0.0
        %563 = vmatpush1.xpose.msra.mxu0 0.0
        %564 = vmatprep.subr.mxu0 0.0
        %565 = vmatpush1.xpose.msra.mxu0 0.0
        %566 = vmatprep.subr.mxu0 0.0
        %567 = vmatpush1.xpose.msra.mxu0 0.0
        %568 = vmatprep.subr.mxu0 0.0
        %569 = vmatpush1.xpose.msra.mxu0 0.0
        %570 = vmatprep.subr.mxu0 0.0
        %571 = vmatpush1.xpose.msra.mxu0 0.0
        %572 = vmatprep.subr.mxu0 0.0
        %573 = vmatpush1.xpose.msra.mxu0 0.0
        %574 = vmatprep.subr.mxu0 0.0
        %575 = vmatpush1.xpose.msra.mxu0 0.0
        %576 = vmatprep.subr.mxu0 0.0
        %577 = vmatpush1.xpose.msra.mxu0 0.0
        %578 = vmatprep.subr.mxu0 0.0
        %579 = vmatpush1.xpose.msra.mxu0 0.0
        %580 = vmatprep.subr.mxu0 0.0
        %581 = vmatpush1.xpose.msra.mxu0 0.0
        %582 = vmatprep.subr.mxu0 0.0
        %583 = vmatpush1.xpose.msra.mxu0 0.0
        %584 = vmatprep.subr.mxu0 0.0
        %585 = vmatpush1.xpose.msra.mxu0 0.0
        %586 = vmatprep.subr.mxu0 0.0
        %587 = vmatpush1.xpose.msra.mxu0 0.0
        %588 = vmatprep.subr.mxu0 0.0
        %589 = vmatpush1.xpose.msra.mxu0 0.0
        %590 = vmatprep.subr.mxu0 0.0
        %591 = vmatpush1.xpose.msra.mxu0 0.0
        %592 = vmatprep.subr.mxu0 0.0
        %593 = vmatpush1.xpose.msra.mxu0 0.0
        %594 = vmatprep.subr.mxu0 0.0
        %595 = vmatpush1.xpose.msra.mxu0 0.0
        %596 = vmatprep.subr.mxu0 0.0
        %597 = vmatpush1.xpose.msra.mxu0 0.0
        %598 = vmatprep.subr.mxu0 0.0
        %599 = vmatpush1.xpose.msra.mxu0 0.0
        %600 = vmatprep.subr.mxu0 0.0
        %601 = vmatpush1.xpose.msra.mxu0 0.0
        %602 = vmatprep.subr.mxu0 0.0
        %603 = vmatpush1.xpose.msra.mxu0 0.0
        %604 = vmatprep.subr.mxu0 0.0
        %605 = vmatpush1.xpose.msra.mxu0 0.0
        %606 = vmatprep.mubr.f32.mxu0 0.0
        %607 = vmatmul.mubr.f32.gmra.mrb[0].mxu0 %v455
        %v608 = vpop.f32.mrb[0].mxu0
        %v609 = vadd.f32 0.0, %v608
        %v610 = vpop.f32.mrb[0].mxu0
        %611 = vmatprep.mubr.f32.mxu0 0.0
        %612 = vmatmul.mubr.f32.gmra.mrb[0].mxu0 %v461
        %v613 = vpop.f32.mrb[0].mxu0
        %v614 = vadd.f32 0.0, %v613
        %v615 = vpop.f32.mrb[0].mxu0
        %616 = vdwg.mxu0
        %v617 = vmul.f32 %v609, 0.088388346
        %v618 = vmul.f32 %v614, 0.088388346
        %vm619 = vcmp.eq.s32.totalorder %v540, 0
        %v620 = vsel %vm619, 1, 0
        %v621 = vlaneseq
        %v622 = vshrl.u32 %v621, 7
        %v623 = vsub.s32 0, %v622
        %v624 = vrot.slane %v620, %v623
        %vm625 = vcmp.eq.s32.totalorder %v624, 1
        %v626 = vsel %vm625, -1e+10, %v617
        %v627 = vsel %vm625, -1e+10, %v618
        %vm628 = vcmask 130048
        %v629 = vsel %vm628, %v626, -inf
        %630 = vmax.xlane.f32.xlu0 %v629
        %v631 = vpop.xlane.xlu0 %630
        %v632 = vsel %vm628, %v627, -inf
        %633 = vmax.xlane.f32.xlu0 %v632
        %v634 = vpop.xlane.xlu0 %633
        %v635 = vsub.f32 %v626, %v631
        %v636 = vsub.f32 %v627, %v634
        %v637 = vmul.f32 %v635, 1.442695
        %v638 = vpow.pop %v637
        %v639 = vmul.f32 %v636, 1.442695
        %v640 = vpow.pop %v639
        %v641 = vsel %vm628, %v638, 0.0
        %642 = vadd.xlane.f32.xlu0 %v641
        %v643 = vpop.xlane.xlu0 %642
        %v644 = vsel %vm628, %v640, 0.0
        %645 = vadd.xlane.f32.xlu0 %v644
        %v646 = vpop.xlane.xlu0 %645
        %v647 = vrcp.pop %v643
        %v648 = vmul.f32 %v638, %v647
        %v649 = vrcp.pop %v646
        %v650 = vmul.f32 %v640, %v649
        %651 = vst.msk [vmem:[%s331] sm:$0xff] %vm628, %v648
        %652 = vst.msk [vmem:[%s331 + $0x8] sm:$0xff] %vm628, %v650
        %v654 = vlaneseq
        %v655 = vshrl.u32 %v654, 7
        %v656 = vsub.s32 0, %v655
        %v657 = vrot.slane %v541, %v656
        %658 = vset.pattern.permute.xlu0 0
        %659 = vperm.xlu0 %658, %v657
        %v660 = vpop.permute.xlu0 %659
        %v662 = vmul.f32 %v648, %v660
        %v663 = vmul.f32 %v650, %v660
        %v665 = vsel %vm628, %v662, 0
        %v668 = vsel %vm628, %v663, 0
        %670 = vmatprep.subr.mxu0 0.0
        %671 = vmatpush1.msra.mxu0 %v532
        %672 = vmatprep.subr.mxu0 0.0
        %673 = vmatpush1.msra.mxu0 %v537
        %674 = vmatprep.subr.mxu0 0.0
        %675 = vmatpush1.msra.mxu0 0.0
        %676 = vmatprep.subr.mxu0 0.0
        %677 = vmatpush1.msra.mxu0 0.0
        %678 = vmatprep.subr.mxu0 0.0
        %679 = vmatpush1.msra.mxu0 0.0
        %680 = vmatprep.subr.mxu0 0.0
        %681 = vmatpush1.msra.mxu0 0.0
        %682 = vmatprep.subr.mxu0 0.0
        %683 = vmatpush1.msra.mxu0 0.0
        %684 = vmatprep.subr.mxu0 0.0
        %685 = vmatpush1.msra.mxu0 0.0
        %686 = vmatprep.subr.mxu0 0.0
        %687 = vmatpush1.msra.mxu0 0.0
        %688 = vmatprep.subr.mxu0 0.0
        %689 = vmatpush1.msra.mxu0 0.0
        %690 = vmatprep.subr.mxu0 0.0
        %691 = vmatpush1.msra.mxu0 0.0
        %692 = vmatprep.subr.mxu0 0.0
        %693 = vmatpush1.msra.mxu0 0.0
        %694 = vmatprep.subr.mxu0 0.0
        %695 = vmatpush1.msra.mxu0 0.0
        %696 = vmatprep.subr.mxu0 0.0
        %697 = vmatpush1.msra.mxu0 0.0
        %698 = vmatprep.subr.mxu0 0.0
        %699 = vmatpush1.msra.mxu0 0.0
        %700 = vmatprep.subr.mxu0 0.0
        %701 = vmatpush1.msra.mxu0 0.0
        %702 = vmatprep.subr.mxu0 0.0
        %703 = vmatpush1.msra.mxu0 0.0
        %704 = vmatprep.subr.mxu0 0.0
        %705 = vmatpush1.msra.mxu0 0.0
        %706 = vmatprep.subr.mxu0 0.0
        %707 = vmatpush1.msra.mxu0 0.0
        %708 = vmatprep.subr.mxu0 0.0
        %709 = vmatpush1.msra.mxu0 0.0
        %710 = vmatprep.subr.mxu0 0.0
        %711 = vmatpush1.msra.mxu0 0.0
        %712 = vmatprep.subr.mxu0 0.0
        %713 = vmatpush1.msra.mxu0 0.0
        %714 = vmatprep.subr.mxu0 0.0
        %715 = vmatpush1.msra.mxu0 0.0
        %716 = vmatprep.subr.mxu0 0.0
        %717 = vmatpush1.msra.mxu0 0.0
        %718 = vmatprep.subr.mxu0 0.0
        %719 = vmatpush1.msra.mxu0 0.0
        %720 = vmatprep.subr.mxu0 0.0
        %721 = vmatpush1.msra.mxu0 0.0
        %722 = vmatprep.subr.mxu0 0.0
        %723 = vmatpush1.msra.mxu0 0.0
        %724 = vmatprep.subr.mxu0 0.0
        %725 = vmatpush1.msra.mxu0 0.0
        %726 = vmatprep.subr.mxu0 0.0
        %727 = vmatpush1.msra.mxu0 0.0
        %728 = vmatprep.subr.mxu0 0.0
        %729 = vmatpush1.msra.mxu0 0.0
        %730 = vmatprep.subr.mxu0 0.0
        %731 = vmatpush1.msra.mxu0 0.0
        %732 = vmatprep.subr.mxu0 0.0
        %733 = vmatpush1.msra.mxu0 0.0
        %734 = vmatprep.mubr.f32.mxu0 0.0
        %735 = vmatmul.mubr.f32.gmra.mrb[0].mxu0 %v665
        %v736 = vpop.f32.mrb[0].mxu0
        %v737 = vadd.f32 0.0, %v736
        %v738 = vpop.f32.mrb[0].mxu0
        %739 = vmatprep.mubr.f32.mxu0 0.0
        %740 = vmatmul.mubr.f32.gmra.mrb[0].mxu0 %v668
        %v741 = vpop.f32.mrb[0].mxu0
        %v742 = vadd.f32 0.0, %v741
        %v743 = vpop.f32.mrb[0].mxu0
        %744 = vdwg.mxu0
        %v745 = vld [vmem:[#allocation7] sm:$0xff]
        %v746 = vld [vmem:[#allocation7 + $0x8] sm:$0xff]
        %v747 = vld [vmem:[#allocation7 + $0x10] sm:$0xff]
        %v748 = vld [vmem:[#allocation7 + $0x18] sm:$0xff]
        %v749 = vld [vmem:[#allocation7 + $0x20] sm:$0xff]
        %v750 = vld [vmem:[#allocation7 + $0x28] sm:$0xff]
        %v751 = vld [vmem:[#allocation7 + $0x30] sm:$0xff]
        %v752 = vld [vmem:[#allocation7 + $0x38] sm:$0xff]
        %v753 = vld [vmem:[#allocation7 + $0x40] sm:$0xff]
        %v754 = vld [vmem:[#allocation7 + $0x48] sm:$0xff]
        %v755 = vld [vmem:[#allocation7 + $0x50] sm:$0xff]
        %v756 = vld [vmem:[#allocation7 + $0x58] sm:$0xff]
        %v757 = vld [vmem:[#allocation7 + $0x60] sm:$0xff]
        %v758 = vld [vmem:[#allocation7 + $0x68] sm:$0xff]
        %v759 = vld [vmem:[#allocation7 + $0x70] sm:$0xff]
        %v760 = vld [vmem:[#allocation7 + $0x78] sm:$0xff]
        %761 = vmatprep.subr.mxu0 0.0
        %762 = vmatpush1.msra.mxu0 %v745
        %763 = vmatprep.subr.mxu0 0.0
        %764 = vmatpush1.msra.mxu0 %v746
        %765 = vmatprep.subr.mxu0 0.0
        %766 = vmatpush1.msra.mxu0 %v747
        %767 = vmatprep.subr.mxu0 0.0
        %768 = vmatpush1.msra.mxu0 %v748
        %769 = vmatprep.subr.mxu0 0.0
        %770 = vmatpush1.msra.mxu0 %v749
        %771 = vmatprep.subr.mxu0 0.0
        %772 = vmatpush1.msra.mxu0 %v750
        %773 = vmatprep.subr.mxu0 0.0
        %774 = vmatpush1.msra.mxu0 %v751
        %775 = vmatprep.subr.mxu0 0.0
        %776 = vmatpush1.msra.mxu0 %v752
        %777 = vmatprep.subr.mxu0 0.0
        %778 = vmatpush1.msra.mxu0 %v753
        %779 = vmatprep.subr.mxu0 0.0
        %780 = vmatpush1.msra.mxu0 %v754
        %781 = vmatprep.subr.mxu0 0.0
        %782 = vmatpush1.msra.mxu0 %v755
        %783 = vmatprep.subr.mxu0 0.0
        %784 = vmatpush1.msra.mxu0 %v756
        %785 = vmatprep.subr.mxu0 0.0
        %786 = vmatpush1.msra.mxu0 %v757
        %787 = vmatprep.subr.mxu0 0.0
        %788 = vmatpush1.msra.mxu0 %v758
        %789 = vmatprep.subr.mxu0 0.0
        %790 = vmatpush1.msra.mxu0 %v759
        %791 = vmatprep.subr.mxu0 0.0
        %792 = vmatpush1.msra.mxu0 %v760
        %793 = vmatprep.subr.mxu0 0.0
        %794 = vmatpush1.msra.mxu0 0.0
        %795 = vmatprep.subr.mxu0 0.0
        %796 = vmatpush1.msra.mxu0 0.0
        %797 = vmatprep.subr.mxu0 0.0
        %798 = vmatpush1.msra.mxu0 0.0
        %799 = vmatprep.subr.mxu0 0.0
        %800 = vmatpush1.msra.mxu0 0.0
        %801 = vmatprep.subr.mxu0 0.0
        %802 = vmatpush1.msra.mxu0 0.0
        %803 = vmatprep.subr.mxu0 0.0
        %804 = vmatpush1.msra.mxu0 0.0
        %805 = vmatprep.subr.mxu0 0.0
        %806 = vmatpush1.msra.mxu0 0.0
        %807 = vmatprep.subr.mxu0 0.0
        %808 = vmatpush1.msra.mxu0 0.0
        %809 = vmatprep.subr.mxu0 0.0
        %810 = vmatpush1.msra.mxu0 0.0
        %811 = vmatprep.subr.mxu0 0.0
        %812 = vmatpush1.msra.mxu0 0.0
        %813 = vmatprep.subr.mxu0 0.0
        %814 = vmatpush1.msra.mxu0 0.0
        %815 = vmatprep.subr.mxu0 0.0
        %816 = vmatpush1.msra.mxu0 0.0
        %817 = vmatprep.subr.mxu0 0.0
        %818 = vmatpush1.msra.mxu0 0.0
        %819 = vmatprep.subr.mxu0 0.0
        %820 = vmatpush1.msra.mxu0 0.0
        %821 = vmatprep.subr.mxu0 0.0
        %822 = vmatpush1.msra.mxu0 0.0
        %823 = vmatprep.subr.mxu0 0.0
        %824 = vmatpush1.msra.mxu0 0.0
        %825 = vmatprep.mubr.f32.mxu0 0.0
        %826 = vmatmul.mubr.f32.gmra.mrb[0].mxu0 %v737
        %v827 = vpop.f32.mrb[0].mxu0
        %v828 = vadd.f32 0.0, %v827
        %v829 = vpop.f32.mrb[0].mxu0
        %830 = vmatprep.mubr.f32.mxu0 0.0
        %831 = vmatmul.mubr.f32.gmra.mrb[0].mxu0 %v742
        %v832 = vpop.f32.mrb[0].mxu0
        %v833 = vadd.f32 0.0, %v832
        %v834 = vpop.f32.mrb[0].mxu0
        %835 = vdwg.mxu0
        %836 = vst [vmem:[%s324] sm:$0xff] %v828
        %837 = vst [vmem:[%s324 + $0x8] sm:$0xff] %v833
        %s838 = sand.u32 %s156, 1
        %s839 = scalar_lea.sflag [#allocation4], %s838
        %s840 = sand.u32 %s156, 1
        %s841 = smul.addr %s840, 16
        %s842 = scalar_lea.vmem [#allocation8], %s841
        %s843 = sand.u32 %s182, 1
        %s844 = scalar_lea.sflag [#allocation10], %s843
        %s845 = sand.u32 %s182, 1
        %s846 = smul.addr %s845, 16
        %s847 = scalar_lea.vmem [#allocation9], %s846
        // Predicated region
        $region53: #{tpu_custom_call.1} parent=39 // pred_check
          %p848 = pneg %p166
        $region54: #{tpu_custom_call.1} parent=39 // pred_check_branch
          %850 = sbr.rel (%p848) target = $region56
        $region55: #{tpu_custom_call.1} parent=39 // pred_region
          %s852 = ssub.s32 256, 256
          %853 = vsyncadd %s839, %s852
          %s854 = smul.addr %s28, 2
          %s855 = smul.addr %s854, 128
          %s856 = scalar_lea.hbm %s5, %s855
          %s857 = sshll.u32 %s842, 4
          %s858 = int_to_ptr.vmem [resolvable:$true] %s857
          %863 = dma.vmem_to_hbm [thread:$0]  %s858, 256, %s856, %s839, 128, 128, 8
        $region56: #{tpu_custom_call.1} parent=39 // pred_fallthru
          _
        // Predicated region
        $region57: #{tpu_custom_call.1} parent=39 // pred_check
          %p864 = pneg %p192
        $region58: #{tpu_custom_call.1} parent=39 // pred_check_branch
          %866 = sbr.rel (%p864) target = $region60
        $region59: #{tpu_custom_call.1} parent=39 // pred_region
          %s868 = ssub.s32 256, 256
          %869 = vsyncadd %s844, %s868
          %s870 = smul.addr %s28, 2
          %s871 = smul.addr %s870, 128
          %s872 = scalar_lea.hbm %s6, %s871
          %s873 = sshll.u32 %s847, 4
          %s874 = int_to_ptr.vmem [resolvable:$true] %s873
          %879 = dma.vmem_to_hbm [thread:$0]  %s874, 256, %s872, %s844, 128, 128, 8
        $region60: #{tpu_custom_call.1} parent=39 // pred_fallthru
          _
      $region40: #{tpu_custom_call.1} parent=5 // pred_fallthru
        _
      %p880 = scmp.le.s32.totalorder 2, %s23
      // Predicated region
      $region61: #{tpu_custom_call.1} parent=5 // pred_check
        %p881 = pneg %p880
      $region62: #{tpu_custom_call.1} parent=5 // pred_check_branch
        %883 = sbr.rel (%p881) target = $region64
      $region63: #{tpu_custom_call.1} parent=5 // pred_region
        %s884 = ssub.s32 %s23, 2
        // Predicated region
        $region65: #{tpu_custom_call.1} parent=63 // pred_check
          %p885 = pneg %p172
        $region66: #{tpu_custom_call.1} parent=63 // pred_check_branch
          %887 = sbr.rel (%p885) target = $region68
        $region67: #{tpu_custom_call.1} parent=63 // pred_region
          %s888 = sand.u32 %s157, 1
          %s889 = scalar_lea.sflag [#allocation4], %s888
          %s890 = sand.u32 %s157, 1
          %s891 = smul.addr %s890, 16
          %s892 = scalar_lea.vmem [#allocation8], %s891
          %893 = dma.done %s889, 256
        $region68: #{tpu_custom_call.1} parent=63 // pred_fallthru
          _
        // Predicated region
        $region69: #{tpu_custom_call.1} parent=63 // pred_check
          %p894 = pneg %p198
        $region70: #{tpu_custom_call.1} parent=63 // pred_check_branch
          %896 = sbr.rel (%p894) target = $region72
        $region71: #{tpu_custom_call.1} parent=63 // pred_region
          %s897 = sand.u32 %s183, 1
          %s898 = scalar_lea.sflag [#allocation10], %s897
          %s899 = sand.u32 %s183, 1
          %s900 = smul.addr %s899, 16
          %s901 = scalar_lea.vmem [#allocation9], %s900
          %902 = dma.done %s898, 256
        $region72: #{tpu_custom_call.1} parent=63 // pred_fallthru
          _
      $region64: #{tpu_custom_call.1} parent=5 // pred_fallthru
        _
    $region6: #{tpu_custom_call.1} parent=1 // loop_footer
      %s27 = sadd.s32 1, %s23
    $region7: #{tpu_custom_call.1} parent=1 // loop_footer_branch
      %22 = sbr.rel target = $region3
    $region8: #{tpu_custom_call.1} parent=1 // loop_exit
      _
    %903 = vsyncpa [#allocation3], 1
    %s904 = scalar_lea.sflag [#allocation3], 1
    %905 = vsyncpa %s904, 1
    %906 = vsyncpa [#allocation6], 1
    %907 = vsyncpa [#allocation4], 1
    %s908 = scalar_lea.sflag [#allocation4], 1
    %909 = vsyncpa %s908, 1
    %910 = vsyncpa [#allocation10], 1
    %s911 = scalar_lea.sflag [#allocation10], 1
    %912 = vsyncpa %s911, 1

</llo_original>
